<compile_context>
chip_gen: v7x
topology: tpu7x:2x2x1
jax: 0.10.0
libtpu: 0.0.40
codegen_flags: <defaults>
</compile_context>

<pallas_src>
import jax
import jax.numpy as jnp
from jax.experimental import pallas as pl
from jax.experimental.pallas import tpu as pltpu

IN_FEATURES = 28 * 28      # 784
OUT_FEATURES = 10          # real logits
OUT_PADDED = 128           # lane-dense output width
NEG_BIG = -1e30            # padded-column bias -> exp() underflows to 0 (f32 math)


def _round_up(n: int, m: int) -> int:
    return ((n + m - 1) // m) * m


def linear_softmax_kernel(x_ref, wt_ref, b_ref, o_ref):
    # x_ref : (TB, 784) f32/bf16   wt_ref : (784, 128) f32
    # b_ref : (1, 128)  f32        o_ref  : (TB, 128)  bf16
    logits = jnp.dot(x_ref[...], wt_ref[...],
                     preferred_element_type=jnp.float32) + b_ref[...]
    # Padded columns carry bias = -1e30 (kept in f32) so exp() underflows to 0.
    # Numerically-stable softmax over axis=1 (matches torch softmax dim=1).
    m = jnp.max(logits, axis=1, keepdims=True)
    e = jnp.exp(logits - m)
    denom = jnp.sum(e, axis=1, keepdims=True)
    # Exact divide (its cost is hidden under the HBM bottleneck); bf16 store
    # halves output writeback bytes.
    o_ref[...] = (e / denom).astype(o_ref.dtype)


def prepare_params(weight, bias):
    """One-time parameter prep (transpose + lane padding).

    weight : (10, 784) float32  (PyTorch nn.Linear layout: [out, in])
    bias   : (10,)     float32
    returns: wt_pad (784, 128) f32, b_pad (1, 128) f32
    """
    wt = weight.astype(jnp.float32).T                              # (784, 10)
    wt_pad = jnp.zeros((IN_FEATURES, OUT_PADDED), jnp.float32)
    wt_pad = wt_pad.at[:, :OUT_FEATURES].set(wt)
    b_pad = jnp.full((1, OUT_PADDED), NEG_BIG, jnp.float32)
    b_pad = b_pad.at[0, :OUT_FEATURES].set(bias.astype(jnp.float32))
    return wt_pad, b_pad


@jax.jit
def model_forward(x, wt_pad, b_pad):
    """Equivalent of Model.forward.

    x      : (B, 1, 28, 28) or (B, 784), float32 (bf16 also accepted as-is,
             which halves the dominant HBM read traffic; no wrapper cast)
    wt_pad : (784, 128) float32  (from prepare_params)
    b_pad  : (1, 128)   float32  (from prepare_params)
    returns: (B, 10)    float32 softmax probabilities
    """
    B = x.shape[0]
    x2d = x.reshape(B, IN_FEATURES)                  # free for contiguous NCHW
    if x2d.dtype not in (jnp.float32, jnp.bfloat16):
        x2d = x2d.astype(jnp.float32)                # only for exotic dtypes

    # Batch tile: multiple of 16 (safe sublane tiling for bf16 in/out), split
    # into >= 2 grid steps so both v7x TensorCores get work, capped at 512
    # (HBM-roofline fraction plateaus at 512-1024; VMEM footprint stays ~4 MB,
    # far below every chip's scoped default).  No batch padding: Pallas masks
    # the partial trailing block's writeback.
    # NOTE: for tiny batches (B < ~128) a plain fused XLA matmul+softmax would
    # avoid the custom-call boundary; the Pallas path is kept here so the
    # kernel is always exercised.
    if B <= 16:
        TB = B                                       # single full-extent block
    else:
        B16 = _round_up(B, 16)
        TB = min(512, _round_up(pl.cdiv(B16, 2), 16))
    grid = (pl.cdiv(B, TB),)

    out_pad = pl.pallas_call(
        linear_softmax_kernel,
        out_shape=jax.ShapeDtypeStruct((B, OUT_PADDED), jnp.bfloat16),
        grid=grid,
        in_specs=[
            pl.BlockSpec((TB, IN_FEATURES), lambda i: (i, 0)),          # streamed x
            pl.BlockSpec((IN_FEATURES, OUT_PADDED), lambda i: (0, 0)),  # resident W^T
            pl.BlockSpec((1, OUT_PADDED), lambda i: (0, 0)),            # resident bias
        ],
        out_specs=pl.BlockSpec((TB, OUT_PADDED), lambda i: (i, 0)),
        compiler_params=pltpu.CompilerParams(
            dimension_semantics=("parallel",)),
    )(x2d, wt_pad, b_pad)

    return out_pad[:B, :OUT_FEATURES].astype(jnp.float32)


if __name__ == "__main__":
    key = jax.random.PRNGKey(0)
    B = 4
    x = jax.random.normal(key, (B, 1, 28, 28), dtype=jnp.float32)

    # Deterministic parameter init, mirroring the module's __init__:
    # fc1.weight and fc1.bias are zeroed.
    weight = jnp.zeros((OUT_FEATURES, IN_FEATURES), dtype=jnp.float32)
    bias = jnp.zeros((OUT_FEATURES,), dtype=jnp.float32)
    wt_pad, b_pad = prepare_params(weight, bias)

    out = model_forward(x, wt_pad, b_pad)
    out = jax.block_until_ready(out)

    # Zero weights/bias -> softmax of zeros -> uniform 1/10; rows sum to ~1
    # (bf16 output store limits absolute accuracy to ~1e-4 per element).
    assert out.shape == (B, OUT_FEATURES)
    assert out.dtype == jnp.float32
    assert jnp.allclose(out, jnp.full((B, OUT_FEATURES), 0.1, jnp.float32), atol=2e-3)
    assert jnp.allclose(jnp.sum(out, axis=1), jnp.ones((B,), jnp.float32), atol=3e-3)

    # Second check with random (non-zero) parameters and a batch that is not a
    # multiple of the tile (exercises the partial trailing block path) against
    # a plain-JAX reference.
    B2 = 37
    kw, kb, kx = jax.random.split(jax.random.PRNGKey(1), 3)
    w_rnd = 0.01 * jax.random.normal(kw, (OUT_FEATURES, IN_FEATURES), jnp.float32)
    b_rnd = 0.01 * jax.random.normal(kb, (OUT_FEATURES,), jnp.float32)
    x_rnd = jax.random.normal(kx, (B2, 1, 28, 28), jnp.float32)
    out2 = jax.block_until_ready(
        model_forward(x_rnd, *prepare_params(w_rnd, b_rnd)))
    ref2 = jax.nn.softmax(
        x_rnd.reshape(B2, IN_FEATURES) @ w_rnd.T + b_rnd, axis=1)
    assert out2.shape == (B2, OUT_FEATURES)
    assert jnp.allclose(out2, ref2, atol=3e-3, rtol=3e-3)

    print("KERNEL_OK")
</pallas_src>

<mosaic_0001>
module attributes {stable_mosaic.version = 11 : i64} {
  func.func @linear_softmax_kernel(%arg0: i32, %arg1: memref<4x784xf32, #tpu.memory_space<vmem>>, %arg2: memref<784x128xf32, #tpu.memory_space<vmem>>, %arg3: memref<1x128xf32, #tpu.memory_space<vmem>>, %arg4: memref<4x128xbf16, #tpu.memory_space<vmem>>) attributes {dimension_semantics = [#tpu.dimension_semantics<parallel>], iteration_bounds = array<i64: 1>, scalar_prefetch = 0 : i64, scratch_operands = 0 : i64, tpu.core_type = #tpu.core_type<tc>, window_params = [{transform_indices = @transform_0, window_bounds = array<i64: 4, 784>}, {pipeline_mode = #tpu.pipeline_mode<synchronous>, transform_indices = @transform_1, window_bounds = array<i64: 784, 128>}, {pipeline_mode = #tpu.pipeline_mode<synchronous>, transform_indices = @transform_2, window_bounds = array<i64: 1, 128>}, {transform_indices = @transform_3, window_bounds = array<i64: 4, 128>}]} {
    %c0 = arith.constant 0 : index
    %c0_0 = arith.constant 0 : index
    %0 = vector.load %arg1[%c0, %c0_0] : memref<4x784xf32, #tpu.memory_space<vmem>>, vector<4x784xf32>
    %c0_1 = arith.constant 0 : index
    %c0_2 = arith.constant 0 : index
    %1 = vector.load %arg2[%c0_1, %c0_2] : memref<784x128xf32, #tpu.memory_space<vmem>>, vector<784x128xf32>
    %cst = arith.constant dense<0.000000e+00> : vector<4x128xf32>
    %2 = tpu.matmul %0, %1, %cst {dimension_numbers = #tpu.dot_dimension_numbers<[1], [0], [0], [1], [0, 0, 1, 1], [], []>} : vector<4x784xf32>, vector<784x128xf32>, vector<4x128xf32> -> vector<4x128xf32>
    %c0_3 = arith.constant 0 : index
    %c0_4 = arith.constant 0 : index
    %3 = vector.load %arg3[%c0_3, %c0_4] : memref<1x128xf32, #tpu.memory_space<vmem>>, vector<1x128xf32>
    %4 = vector.broadcast %3 : vector<1x128xf32> to vector<4x128xf32>
    %5 = arith.addf %2, %4 : vector<4x128xf32>
    %cst_5 = arith.constant dense<0xFF800000> : vector<4xf32>
    %6 = vector.multi_reduction <maximumf>, %5, %cst_5 [1] : vector<4x128xf32> to vector<4xf32>
    %7 = vector.shape_cast %6 : vector<4xf32> to vector<4x1xf32>
    %8 = vector.broadcast %7 : vector<4x1xf32> to vector<4x128xf32>
    %9 = arith.subf %5, %8 : vector<4x128xf32>
    %10 = math.exp %9 : vector<4x128xf32>
    %cst_6 = arith.constant dense<0.000000e+00> : vector<4xf32>
    %11 = vector.multi_reduction <add>, %10, %cst_6 [1] : vector<4x128xf32> to vector<4xf32>
    %12 = vector.shape_cast %11 : vector<4xf32> to vector<4x1xf32>
    %13 = vector.broadcast %12 : vector<4x1xf32> to vector<4x128xf32>
    %14 = arith.divf %10, %13 : vector<4x128xf32>
    %15 = arith.truncf %14 : vector<4x128xf32> to vector<4x128xbf16>
    %c0_7 = arith.constant 0 : index
    %c0_8 = arith.constant 0 : index
    %16 = vector.load %arg4[%c0_7, %c0_8] : memref<4x128xbf16, #tpu.memory_space<vmem>>, vector<4x128xbf16>
    tpu.vector_store %arg4[%c0_7, %c0_8], %15 {strides = array<i32>} : memref<4x128xbf16, #tpu.memory_space<vmem>>, vector<4x128xbf16>,
    return
  }
  func.func @transform_0(%arg0: i32) -> (i32, i32) {
    %c0_i32 = arith.constant 0 : i32
    %c0_i32_0 = arith.constant 0 : i32
    return %arg0, %c0_i32 : i32, i32
  }
  func.func @transform_1(%arg0: i32) -> (i32, i32) {
    %c0_i32 = arith.constant 0 : i32
    %c0_i32_0 = arith.constant 0 : i32
    %c0_i32_1 = arith.constant 0 : i32
    return %c0_i32, %c0_i32_0 : i32, i32
  }
  func.func @transform_2(%arg0: i32) -> (i32, i32) {
    %c0_i32 = arith.constant 0 : i32
    %c0_i32_0 = arith.constant 0 : i32
    %c0_i32_1 = arith.constant 0 : i32
    return %c0_i32, %c0_i32_0 : i32, i32
  }
  func.func @transform_3(%arg0: i32) -> (i32, i32) {
    %c0_i32 = arith.constant 0 : i32
    %c0_i32_0 = arith.constant 0 : i32
    return %arg0, %c0_i32 : i32, i32
  }
}

</mosaic_0001>

<llo_original>
// kernel: model_forward.1
$region0: #{model_forward.1}
  #allocation0 [shape = 'u32[]', space=smem, size = 0x4, offset = 0x4, fixed_abs, tag = 'smem constant byte address 0x4 - core index']
  #allocation1 [shape = 'u32[144,128]{1,0:T(1,128)}', space=vmem, size = 0x12000, scoped, tag = 'internal scratch']
  %s0 = inlined_call_operand.vmem [shape: f32[4,784], index: 0, kind: input, shape index: {}]
  %s1 = inlined_call_operand.hbm [shape: f32[784,128], index: 1, kind: input, shape index: {}]
  %s2 = inlined_call_operand.vmem [shape: f32[1,128], index: 2, kind: input, shape index: {}]
  %s3 = inlined_call_operand.vmem [shape: bf16[4,128], index: 3, kind: output, shape index: {}]
  %s4 = sld [smem:[#allocation0]]
  $region26: #{model_forward.1} parent=0
    _
  %s6 = ssub.s32 1, %s4
  %s7 = scalar_select 0, %s6, %s4
  $region1: #{model_forward.1} parent=0
    #allocation2 [shape = 'u8[401408]{0}', space=vmem, size = 0x62000, scoped, tag = 'input window, operand 1, single buffered']
    #allocation3 [shape = 's32[1]{0}', space=sflag, size = 0x4, scoped, tag = 'scoped memory for model_forward.1']
    %8 = vsyncpa [#allocation3], 0
    // Predicated region
    $region2: #{model_forward.1} parent=1 // pred_check
      _
    $region3: #{model_forward.1} parent=1 // pred_check_branch
      %10 = sbr.rel (0) target = $region5
    $region4: #{model_forward.1} parent=1 // pred_region
      _
    $region5: #{model_forward.1} parent=1 // pred_fallthru
      _
    // Predicated region
    $region6: #{model_forward.1} parent=1 // pred_check
      _
    $region7: #{model_forward.1} parent=1 // pred_check_branch
      %12 = sbr.rel (0) target = $region9
    $region8: #{model_forward.1} parent=1 // pred_region
      %s14 = ssub.s32 12544, 12544
      %15 = vsyncadd [#allocation3], %s14
      %s16 = sshll.u32 [#allocation2], 4
      %s17 = int_to_ptr.vmem [resolvable:$true] %s16
      %22 = dma.hbm_to_vmem [thread:$0]  %s1, 12544, %s17, [#allocation3], 128, 128, 8
    $region9: #{model_forward.1} parent=1 // pred_fallthru
      _
    // Predicated region
    $region10: #{model_forward.1} parent=1 // pred_check
      _
    $region11: #{model_forward.1} parent=1 // pred_check_branch
      %24 = sbr.rel (0) target = $region13
    $region12: #{model_forward.1} parent=1 // pred_region
      _
    $region13: #{model_forward.1} parent=1 // pred_fallthru
      _
    // Predicated region
    $region14: #{model_forward.1} parent=1 // pred_check
      _
    $region15: #{model_forward.1} parent=1 // pred_check_branch
      %26 = sbr.rel (0) target = $region17
    $region16: #{model_forward.1} parent=1 // pred_region
      %27 = dma.done [#allocation3], 12544
    $region17: #{model_forward.1} parent=1 // pred_fallthru
      _
    %v28 = vld [vmem:[%s0] sm:$0xff]
    %v29 = vld [vmem:[%s0 + $0x8] sm:$0xff]
    %v30 = vld [vmem:[%s0 + $0x10] sm:$0xff]
    %v31 = vld [vmem:[%s0 + $0x18] sm:$0xf]
    %v32 = vld [vmem:[#allocation2] sm:$0xff]
    %v33 = vld [vmem:[#allocation2 + $0x8] sm:$0xff]
    %v34 = vld [vmem:[#allocation2 + $0x10] sm:$0xff]
    %v35 = vld [vmem:[#allocation2 + $0x18] sm:$0xff]
    %v36 = vld [vmem:[#allocation2 + $0x20] sm:$0xff]
    %v37 = vld [vmem:[#allocation2 + $0x28] sm:$0xff]
    %v38 = vld [vmem:[#allocation2 + $0x30] sm:$0xff]
    %v39 = vld [vmem:[#allocation2 + $0x38] sm:$0xff]
    %v40 = vld [vmem:[#allocation2 + $0x40] sm:$0xff]
    %v41 = vld [vmem:[#allocation2 + $0x48] sm:$0xff]
    %v42 = vld [vmem:[#allocation2 + $0x50] sm:$0xff]
    %v43 = vld [vmem:[#allocation2 + $0x58] sm:$0xff]
    %v44 = vld [vmem:[#allocation2 + $0x60] sm:$0xff]
    %v45 = vld [vmem:[#allocation2 + $0x68] sm:$0xff]
    %v46 = vld [vmem:[#allocation2 + $0x70] sm:$0xff]
    %v47 = vld [vmem:[#allocation2 + $0x78] sm:$0xff]
    %v48 = vld [vmem:[#allocation2 + $0x80] sm:$0xff]
    %v49 = vld [vmem:[#allocation2 + $0x88] sm:$0xff]
    %v50 = vld [vmem:[#allocation2 + $0x90] sm:$0xff]
    %v51 = vld [vmem:[#allocation2 + $0x98] sm:$0xff]
    %v52 = vld [vmem:[#allocation2 + $0xa0] sm:$0xff]
    %v53 = vld [vmem:[#allocation2 + $0xa8] sm:$0xff]
    %v54 = vld [vmem:[#allocation2 + $0xb0] sm:$0xff]
    %v55 = vld [vmem:[#allocation2 + $0xb8] sm:$0xff]
    %v56 = vld [vmem:[#allocation2 + $0xc0] sm:$0xff]
    %v57 = vld [vmem:[#allocation2 + $0xc8] sm:$0xff]
    %v58 = vld [vmem:[#allocation2 + $0xd0] sm:$0xff]
    %v59 = vld [vmem:[#allocation2 + $0xd8] sm:$0xff]
    %v60 = vld [vmem:[#allocation2 + $0xe0] sm:$0xff]
    %v61 = vld [vmem:[#allocation2 + $0xe8] sm:$0xff]
    %v62 = vld [vmem:[#allocation2 + $0xf0] sm:$0xff]
    %v63 = vld [vmem:[#allocation2 + $0xf8] sm:$0xff]
    %v64 = vld [vmem:[#allocation2 + $0x100] sm:$0xff]
    %v65 = vld [vmem:[#allocation2 + $0x108] sm:$0xff]
    %v66 = vld [vmem:[#allocation2 + $0x110] sm:$0xff]
    %v67 = vld [vmem:[#allocation2 + $0x118] sm:$0xff]
    %v68 = vld [vmem:[#allocation2 + $0x120] sm:$0xff]
    %v69 = vld [vmem:[#allocation2 + $0x128] sm:$0xff]
    %v70 = vld [vmem:[#allocation2 + $0x130] sm:$0xff]
    %v71 = vld [vmem:[#allocation2 + $0x138] sm:$0xff]
    %v72 = vld [vmem:[#allocation2 + $0x140] sm:$0xff]
    %v73 = vld [vmem:[#allocation2 + $0x148] sm:$0xff]
    %v74 = vld [vmem:[#allocation2 + $0x150] sm:$0xff]
    %v75 = vld [vmem:[#allocation2 + $0x158] sm:$0xff]
    %v76 = vld [vmem:[#allocation2 + $0x160] sm:$0xff]
    %v77 = vld [vmem:[#allocation2 + $0x168] sm:$0xff]
    %v78 = vld [vmem:[#allocation2 + $0x170] sm:$0xff]
    %v79 = vld [vmem:[#allocation2 + $0x178] sm:$0xff]
    %v80 = vld [vmem:[#allocation2 + $0x180] sm:$0xff]
    %v81 = vld [vmem:[#allocation2 + $0x188] sm:$0xff]
    %v82 = vld [vmem:[#allocation2 + $0x190] sm:$0xff]
    %v83 = vld [vmem:[#allocation2 + $0x198] sm:$0xff]
    %v84 = vld [vmem:[#allocation2 + $0x1a0] sm:$0xff]
    %v85 = vld [vmem:[#allocation2 + $0x1a8] sm:$0xff]
    %v86 = vld [vmem:[#allocation2 + $0x1b0] sm:$0xff]
    %v87 = vld [vmem:[#allocation2 + $0x1b8] sm:$0xff]
    %v88 = vld [vmem:[#allocation2 + $0x1c0] sm:$0xff]
    %v89 = vld [vmem:[#allocation2 + $0x1c8] sm:$0xff]
    %v90 = vld [vmem:[#allocation2 + $0x1d0] sm:$0xff]
    %v91 = vld [vmem:[#allocation2 + $0x1d8] sm:$0xff]
    %v92 = vld [vmem:[#allocation2 + $0x1e0] sm:$0xff]
    %v93 = vld [vmem:[#allocation2 + $0x1e8] sm:$0xff]
    %v94 = vld [vmem:[#allocation2 + $0x1f0] sm:$0xff]
    %v95 = vld [vmem:[#allocation2 + $0x1f8] sm:$0xff]
    %v96 = vld [vmem:[#allocation2 + $0x200] sm:$0xff]
    %v97 = vld [vmem:[#allocation2 + $0x208] sm:$0xff]
    %v98 = vld [vmem:[#allocation2 + $0x210] sm:$0xff]
    %v99 = vld [vmem:[#allocation2 + $0x218] sm:$0xff]
    %v100 = vld [vmem:[#allocation2 + $0x220] sm:$0xff]
    %v101 = vld [vmem:[#allocation2 + $0x228] sm:$0xff]
    %v102 = vld [vmem:[#allocation2 + $0x230] sm:$0xff]
    %v103 = vld [vmem:[#allocation2 + $0x238] sm:$0xff]
    %v104 = vld [vmem:[#allocation2 + $0x240] sm:$0xff]
    %v105 = vld [vmem:[#allocation2 + $0x248] sm:$0xff]
    %v106 = vld [vmem:[#allocation2 + $0x250] sm:$0xff]
    %v107 = vld [vmem:[#allocation2 + $0x258] sm:$0xff]
    %v108 = vld [vmem:[#allocation2 + $0x260] sm:$0xff]
    %v109 = vld [vmem:[#allocation2 + $0x268] sm:$0xff]
    %v110 = vld [vmem:[#allocation2 + $0x270] sm:$0xff]
    %v111 = vld [vmem:[#allocation2 + $0x278] sm:$0xff]
    %v112 = vld [vmem:[#allocation2 + $0x280] sm:$0xff]
    %v113 = vld [vmem:[#allocation2 + $0x288] sm:$0xff]
    %v114 = vld [vmem:[#allocation2 + $0x290] sm:$0xff]
    %v115 = vld [vmem:[#allocation2 + $0x298] sm:$0xff]
    %v116 = vld [vmem:[#allocation2 + $0x2a0] sm:$0xff]
    %v117 = vld [vmem:[#allocation2 + $0x2a8] sm:$0xff]
    %v118 = vld [vmem:[#allocation2 + $0x2b0] sm:$0xff]
    %v119 = vld [vmem:[#allocation2 + $0x2b8] sm:$0xff]
    %v120 = vld [vmem:[#allocation2 + $0x2c0] sm:$0xff]
    %v121 = vld [vmem:[#allocation2 + $0x2c8] sm:$0xff]
    %v122 = vld [vmem:[#allocation2 + $0x2d0] sm:$0xff]
    %v123 = vld [vmem:[#allocation2 + $0x2d8] sm:$0xff]
    %v124 = vld [vmem:[#allocation2 + $0x2e0] sm:$0xff]
    %v125 = vld [vmem:[#allocation2 + $0x2e8] sm:$0xff]
    %v126 = vld [vmem:[#allocation2 + $0x2f0] sm:$0xff]
    %v127 = vld [vmem:[#allocation2 + $0x2f8] sm:$0xff]
    %v128 = vld [vmem:[#allocation2 + $0x300] sm:$0xff]
    %v129 = vld [vmem:[#allocation2 + $0x308] sm:$0xff]
    %v130 = vld [vmem:[%s2] sm:$0x1]
    %v132 = vlaneseq
    %v133 = vshrl.u32 %v132, 7
    %v134 = vsub.s32 0, %v133
    %v135 = vrot.slane %v130, %v134
    %v141 = vcombine.high %v28, %v28
    %v142 = vcombine.high %v29, %v29
    %v143 = vcombine.high %v30, %v30
    %vm147 = vcmask 130048
    %v148 = vsel %vm147, %v31, 0
    %150 = vmatprep.subr.mxu0 0.0
    %151 = vmatpush1.msra.mxu0 %v32
    %152 = vmatprep.subr.mxu0 0.0
    %153 = vmatpush1.msra.mxu0 %v33
    %154 = vmatprep.subr.mxu0 0.0
    %155 = vmatpush1.msra.mxu0 %v34
    %156 = vmatprep.subr.mxu0 0.0
    %157 = vmatpush1.msra.mxu0 %v35
    %158 = vmatprep.subr.mxu0 0.0
    %159 = vmatpush1.msra.mxu0 %v36
    %160 = vmatprep.subr.mxu0 0.0
    %161 = vmatpush1.msra.mxu0 %v37
    %162 = vmatprep.subr.mxu0 0.0
    %163 = vmatpush1.msra.mxu0 %v38
    %164 = vmatprep.subr.mxu0 0.0
    %165 = vmatpush1.msra.mxu0 %v39
    %166 = vmatprep.subr.mxu0 0.0
    %167 = vmatpush1.msra.mxu0 %v40
    %168 = vmatprep.subr.mxu0 0.0
    %169 = vmatpush1.msra.mxu0 %v41
    %170 = vmatprep.subr.mxu0 0.0
    %171 = vmatpush1.msra.mxu0 %v42
    %172 = vmatprep.subr.mxu0 0.0
    %173 = vmatpush1.msra.mxu0 %v43
    %174 = vmatprep.subr.mxu0 0.0
    %175 = vmatpush1.msra.mxu0 %v44
    %176 = vmatprep.subr.mxu0 0.0
    %177 = vmatpush1.msra.mxu0 %v45
    %178 = vmatprep.subr.mxu0 0.0
    %179 = vmatpush1.msra.mxu0 %v46
    %180 = vmatprep.subr.mxu0 0.0
    %181 = vmatpush1.msra.mxu0 %v47
    %182 = vmatprep.subr.mxu0 0.0
    %183 = vmatpush1.msra.mxu0 %v48
    %184 = vmatprep.subr.mxu0 0.0
    %185 = vmatpush1.msra.mxu0 %v49
    %186 = vmatprep.subr.mxu0 0.0
    %187 = vmatpush1.msra.mxu0 %v50
    %188 = vmatprep.subr.mxu0 0.0
    %189 = vmatpush1.msra.mxu0 %v51
    %190 = vmatprep.subr.mxu0 0.0
    %191 = vmatpush1.msra.mxu0 %v52
    %192 = vmatprep.subr.mxu0 0.0
    %193 = vmatpush1.msra.mxu0 %v53
    %194 = vmatprep.subr.mxu0 0.0
    %195 = vmatpush1.msra.mxu0 %v54
    %196 = vmatprep.subr.mxu0 0.0
    %197 = vmatpush1.msra.mxu0 %v55
    %198 = vmatprep.subr.mxu0 0.0
    %199 = vmatpush1.msra.mxu0 %v56
    %200 = vmatprep.subr.mxu0 0.0
    %201 = vmatpush1.msra.mxu0 %v57
    %202 = vmatprep.subr.mxu0 0.0
    %203 = vmatpush1.msra.mxu0 %v58
    %204 = vmatprep.subr.mxu0 0.0
    %205 = vmatpush1.msra.mxu0 %v59
    %206 = vmatprep.subr.mxu0 0.0
    %207 = vmatpush1.msra.mxu0 %v60
    %208 = vmatprep.subr.mxu0 0.0
    %209 = vmatpush1.msra.mxu0 %v61
    %210 = vmatprep.subr.mxu0 0.0
    %211 = vmatpush1.msra.mxu0 %v62
    %212 = vmatprep.subr.mxu0 0.0
    %213 = vmatpush1.msra.mxu0 %v63
    %214 = vmatprep.mubr.f32.mxu0 %v141
    %215 = vmatmul.mubr.f32.gmra.mrb[0].mxu0 %v28
    %v216 = vpop.f32.mrb[0].mxu0
    %v217 = vadd.f32 %v135, %v216
    %v218 = vpop.f32.mrb[0].mxu0
    %219 = vdwg.mxu0
    %220 = vmatprep.subr.mxu0 0.0
    %221 = vmatpush1.msra.mxu0 %v64
    %222 = vmatprep.subr.mxu0 0.0
    %223 = vmatpush1.msra.mxu0 %v65
    %224 = vmatprep.subr.mxu0 0.0
    %225 = vmatpush1.msra.mxu0 %v66
    %226 = vmatprep.subr.mxu0 0.0
    %227 = vmatpush1.msra.mxu0 %v67
    %228 = vmatprep.subr.mxu0 0.0
    %229 = vmatpush1.msra.mxu0 %v68
    %230 = vmatprep.subr.mxu0 0.0
    %231 = vmatpush1.msra.mxu0 %v69
    %232 = vmatprep.subr.mxu0 0.0
    %233 = vmatpush1.msra.mxu0 %v70
    %234 = vmatprep.subr.mxu0 0.0
    %235 = vmatpush1.msra.mxu0 %v71
    %236 = vmatprep.subr.mxu0 0.0
    %237 = vmatpush1.msra.mxu0 %v72
    %238 = vmatprep.subr.mxu0 0.0
    %239 = vmatpush1.msra.mxu0 %v73
    %240 = vmatprep.subr.mxu0 0.0
    %241 = vmatpush1.msra.mxu0 %v74
    %242 = vmatprep.subr.mxu0 0.0
    %243 = vmatpush1.msra.mxu0 %v75
    %244 = vmatprep.subr.mxu0 0.0
    %245 = vmatpush1.msra.mxu0 %v76
    %246 = vmatprep.subr.mxu0 0.0
    %247 = vmatpush1.msra.mxu0 %v77
    %248 = vmatprep.subr.mxu0 0.0
    %249 = vmatpush1.msra.mxu0 %v78
    %250 = vmatprep.subr.mxu0 0.0
    %251 = vmatpush1.msra.mxu0 %v79
    %252 = vmatprep.subr.mxu0 0.0
    %253 = vmatpush1.msra.mxu0 %v80
    %254 = vmatprep.subr.mxu0 0.0
    %255 = vmatpush1.msra.mxu0 %v81
    %256 = vmatprep.subr.mxu0 0.0
    %257 = vmatpush1.msra.mxu0 %v82
    %258 = vmatprep.subr.mxu0 0.0
    %259 = vmatpush1.msra.mxu0 %v83
    %260 = vmatprep.subr.mxu0 0.0
    %261 = vmatpush1.msra.mxu0 %v84
    %262 = vmatprep.subr.mxu0 0.0
    %263 = vmatpush1.msra.mxu0 %v85
    %264 = vmatprep.subr.mxu0 0.0
    %265 = vmatpush1.msra.mxu0 %v86
    %266 = vmatprep.subr.mxu0 0.0
    %267 = vmatpush1.msra.mxu0 %v87
    %268 = vmatprep.subr.mxu0 0.0
    %269 = vmatpush1.msra.mxu0 %v88
    %270 = vmatprep.subr.mxu0 0.0
    %271 = vmatpush1.msra.mxu0 %v89
    %272 = vmatprep.subr.mxu0 0.0
    %273 = vmatpush1.msra.mxu0 %v90
    %274 = vmatprep.subr.mxu0 0.0
    %275 = vmatpush1.msra.mxu0 %v91
    %276 = vmatprep.subr.mxu0 0.0
    %277 = vmatpush1.msra.mxu0 %v92
    %278 = vmatprep.subr.mxu0 0.0
    %279 = vmatpush1.msra.mxu0 %v93
    %280 = vmatprep.subr.mxu0 0.0
    %281 = vmatpush1.msra.mxu0 %v94
    %282 = vmatprep.subr.mxu0 0.0
    %283 = vmatpush1.msra.mxu0 %v95
    %284 = vmatprep.mubr.f32.mxu0 %v142
    %285 = vmatmul.mubr.f32.gmra.mrb[0].mxu0 %v29
    %v286 = vpop.f32.mrb[0].mxu0
    %v287 = vadd.f32 %v217, %v286
    %v288 = vpop.f32.mrb[0].mxu0
    %289 = vdwg.mxu0
    %290 = vmatprep.subr.mxu0 0.0
    %291 = vmatpush1.msra.mxu0 %v96
    %292 = vmatprep.subr.mxu0 0.0
    %293 = vmatpush1.msra.mxu0 %v97
    %294 = vmatprep.subr.mxu0 0.0
    %295 = vmatpush1.msra.mxu0 %v98
    %296 = vmatprep.subr.mxu0 0.0
    %297 = vmatpush1.msra.mxu0 %v99
    %298 = vmatprep.subr.mxu0 0.0
    %299 = vmatpush1.msra.mxu0 %v100
    %300 = vmatprep.subr.mxu0 0.0
    %301 = vmatpush1.msra.mxu0 %v101
    %302 = vmatprep.subr.mxu0 0.0
    %303 = vmatpush1.msra.mxu0 %v102
    %304 = vmatprep.subr.mxu0 0.0
    %305 = vmatpush1.msra.mxu0 %v103
    %306 = vmatprep.subr.mxu0 0.0
    %307 = vmatpush1.msra.mxu0 %v104
    %308 = vmatprep.subr.mxu0 0.0
    %309 = vmatpush1.msra.mxu0 %v105
    %310 = vmatprep.subr.mxu0 0.0
    %311 = vmatpush1.msra.mxu0 %v106
    %312 = vmatprep.subr.mxu0 0.0
    %313 = vmatpush1.msra.mxu0 %v107
    %314 = vmatprep.subr.mxu0 0.0
    %315 = vmatpush1.msra.mxu0 %v108
    %316 = vmatprep.subr.mxu0 0.0
    %317 = vmatpush1.msra.mxu0 %v109
    %318 = vmatprep.subr.mxu0 0.0
    %319 = vmatpush1.msra.mxu0 %v110
    %320 = vmatprep.subr.mxu0 0.0
    %321 = vmatpush1.msra.mxu0 %v111
    %322 = vmatprep.subr.mxu0 0.0
    %323 = vmatpush1.msra.mxu0 %v112
    %324 = vmatprep.subr.mxu0 0.0
    %325 = vmatpush1.msra.mxu0 %v113
    %326 = vmatprep.subr.mxu0 0.0
    %327 = vmatpush1.msra.mxu0 %v114
    %328 = vmatprep.subr.mxu0 0.0
    %329 = vmatpush1.msra.mxu0 %v115
    %330 = vmatprep.subr.mxu0 0.0
    %331 = vmatpush1.msra.mxu0 %v116
    %332 = vmatprep.subr.mxu0 0.0
    %333 = vmatpush1.msra.mxu0 %v117
    %334 = vmatprep.subr.mxu0 0.0
    %335 = vmatpush1.msra.mxu0 %v118
    %336 = vmatprep.subr.mxu0 0.0
    %337 = vmatpush1.msra.mxu0 %v119
    %338 = vmatprep.subr.mxu0 0.0
    %339 = vmatpush1.msra.mxu0 %v120
    %340 = vmatprep.subr.mxu0 0.0
    %341 = vmatpush1.msra.mxu0 %v121
    %342 = vmatprep.subr.mxu0 0.0
    %343 = vmatpush1.msra.mxu0 %v122
    %344 = vmatprep.subr.mxu0 0.0
    %345 = vmatpush1.msra.mxu0 %v123
    %346 = vmatprep.subr.mxu0 0.0
    %347 = vmatpush1.msra.mxu0 %v124
    %348 = vmatprep.subr.mxu0 0.0
    %349 = vmatpush1.msra.mxu0 %v125
    %350 = vmatprep.subr.mxu0 0.0
    %351 = vmatpush1.msra.mxu0 %v126
    %352 = vmatprep.subr.mxu0 0.0
    %353 = vmatpush1.msra.mxu0 %v127
    %354 = vmatprep.mubr.f32.mxu0 %v143
    %355 = vmatmul.mubr.f32.gmra.mrb[0].mxu0 %v30
    %v356 = vpop.f32.mrb[0].mxu0
    %v357 = vadd.f32 %v287, %v356
    %v358 = vpop.f32.mrb[0].mxu0
    %359 = vdwg.mxu0
    %360 = vmatprep.subr.mxu0 0.0
    %361 = vmatpush1.msra.mxu0 %v128
    %362 = vmatprep.subr.mxu0 0.0
    %363 = vmatpush1.msra.mxu0 %v129
    %364 = vmatprep.subr.mxu0 0.0
    %365 = vmatpush1.msra.mxu0 0.0
    %366 = vmatprep.subr.mxu0 0.0
    %367 = vmatpush1.msra.mxu0 0.0
    %368 = vmatprep.subr.mxu0 0.0
    %369 = vmatpush1.msra.mxu0 0.0
    %370 = vmatprep.subr.mxu0 0.0
    %371 = vmatpush1.msra.mxu0 0.0
    %372 = vmatprep.subr.mxu0 0.0
    %373 = vmatpush1.msra.mxu0 0.0
    %374 = vmatprep.subr.mxu0 0.0
    %375 = vmatpush1.msra.mxu0 0.0
    %376 = vmatprep.subr.mxu0 0.0
    %377 = vmatpush1.msra.mxu0 0.0
    %378 = vmatprep.subr.mxu0 0.0
    %379 = vmatpush1.msra.mxu0 0.0
    %380 = vmatprep.subr.mxu0 0.0
    %381 = vmatpush1.msra.mxu0 0.0
    %382 = vmatprep.subr.mxu0 0.0
    %383 = vmatpush1.msra.mxu0 0.0
    %384 = vmatprep.subr.mxu0 0.0
    %385 = vmatpush1.msra.mxu0 0.0
    %386 = vmatprep.subr.mxu0 0.0
    %387 = vmatpush1.msra.mxu0 0.0
    %388 = vmatprep.subr.mxu0 0.0
    %389 = vmatpush1.msra.mxu0 0.0
    %390 = vmatprep.subr.mxu0 0.0
    %391 = vmatpush1.msra.mxu0 0.0
    %392 = vmatprep.subr.mxu0 0.0
    %393 = vmatpush1.msra.mxu0 0.0
    %394 = vmatprep.subr.mxu0 0.0
    %395 = vmatpush1.msra.mxu0 0.0
    %396 = vmatprep.subr.mxu0 0.0
    %397 = vmatpush1.msra.mxu0 0.0
    %398 = vmatprep.subr.mxu0 0.0
    %399 = vmatpush1.msra.mxu0 0.0
    %400 = vmatprep.subr.mxu0 0.0
    %401 = vmatpush1.msra.mxu0 0.0
    %402 = vmatprep.subr.mxu0 0.0
    %403 = vmatpush1.msra.mxu0 0.0
    %404 = vmatprep.subr.mxu0 0.0
    %405 = vmatpush1.msra.mxu0 0.0
    %406 = vmatprep.subr.mxu0 0.0
    %407 = vmatpush1.msra.mxu0 0.0
    %408 = vmatprep.subr.mxu0 0.0
    %409 = vmatpush1.msra.mxu0 0.0
    %410 = vmatprep.subr.mxu0 0.0
    %411 = vmatpush1.msra.mxu0 0.0
    %412 = vmatprep.subr.mxu0 0.0
    %413 = vmatpush1.msra.mxu0 0.0
    %414 = vmatprep.subr.mxu0 0.0
    %415 = vmatpush1.msra.mxu0 0.0
    %416 = vmatprep.subr.mxu0 0.0
    %417 = vmatpush1.msra.mxu0 0.0
    %418 = vmatprep.subr.mxu0 0.0
    %419 = vmatpush1.msra.mxu0 0.0
    %420 = vmatprep.subr.mxu0 0.0
    %421 = vmatpush1.msra.mxu0 0.0
    %422 = vmatprep.subr.mxu0 0.0
    %423 = vmatpush1.msra.mxu0 0.0
    %424 = vmatprep.mubr.f32.mxu0 0.0
    %425 = vmatmul.mubr.f32.gmra.mrb[0].mxu0 %v148
    %v426 = vpop.f32.mrb[0].mxu0
    %v427 = vadd.f32 %v357, %v426
    %v428 = vpop.f32.mrb[0].mxu0
    %429 = vdwg.mxu0
    %vm430 = vcmask 1043456
    %v431 = vsel %vm430, %v427, -inf
    %432 = vmax.xlane.f32.xlu0 %v431
    %v433 = vpop.xlane.xlu0 %432
    %v434 = vsub.f32 %v427, %v433
    %v435 = vmul.f32 %v434, 1.442695
    %v436 = vpow.pop %v435
    %v437 = vsel %vm430, %v436, 0.0
    %438 = vadd.xlane.f32.xlu0 %v437
    %v439 = vpop.xlane.xlu0 %438
    %v440 = vrcp.pop %v439
    %v441 = vmul.f32 %v436, %v440
    %v442 = vpack.c.bf16 %v441, %v441
    %443 = vst [vmem:[%s3] sm:$0x3] %v442
    // Predicated region
    $region18: #{model_forward.1} parent=1 // pred_check
      _
    $region19: #{model_forward.1} parent=1 // pred_check_branch
      %445 = sbr.rel (0) target = $region21
    $region20: #{model_forward.1} parent=1 // pred_region
      _
    $region21: #{model_forward.1} parent=1 // pred_fallthru
      _
    // Predicated region
    $region22: #{model_forward.1} parent=1 // pred_check
      _
    $region23: #{model_forward.1} parent=1 // pred_check_branch
      %447 = sbr.rel (0) target = $region25
    $region24: #{model_forward.1} parent=1 // pred_region
      _
    $region25: #{model_forward.1} parent=1 // pred_fallthru
      _
    %448 = vsyncpa [#allocation3], 1

</llo_original>
